<compile_context>
chip_gen: v7x
topology: tpu7x:2x2x1
jax: 0.10.0
libtpu: 0.0.40
codegen_flags: <defaults>
</compile_context>

<pallas_src>
import functools

import jax
import jax.numpy as jnp
from jax.experimental import pallas as pl
from jax.experimental.pallas import tpu as pltpu

MAX_LENGTH = 10   # L
HIDDEN = 32       # H (small test size; PyTorch script uses 256)
VOCAB = 40        # output_size

LANE = 128        # TPU lane width; L / V / H outputs are padded to this
NEG = -1e30       # "minus infinity" used to mask padded softmax lanes


def _attn_decoder_kernel(H, L, V, tok_ref, emb_ref, hid_ref, enc_ref, w_ref, b_ref, out_ref):
    f32 = jnp.float32
    tok = tok_ref[0]

    # Embedding row gather from the VMEM-resident table via a one-hot MXU matmul
    # (robust replacement for the old (1, H) gather BlockSpec).
    row_ids = jax.lax.broadcasted_iota(jnp.int32, (1, V), 1)
    onehot = (row_ids == tok).astype(f32)                                  # (1, V)
    emb = jnp.dot(onehot, emb_ref[...], preferred_element_type=f32)        # (1, H)

    hid = hid_ref[...].astype(f32)                                         # (1, H)

    # TODO(synk): nn.Dropout(p=0.1) is identity in eval mode; stochastic masking skipped.

    # --- attention: softmax(Linear(cat(emb, hid))) over the (padded) L lanes ---
    cat1 = jnp.concatenate([emb, hid], axis=1)                             # (1, 2H)
    attn_logits = (jnp.dot(cat1, w_ref[:, 0:LANE], preferred_element_type=f32)
                   + b_ref[0:1, :])                                        # (1, 128); pad lanes = -1e30
    m = jnp.max(attn_logits, axis=-1, keepdims=True)
    e = jnp.exp(attn_logits - m)
    inv = pl.reciprocal(jnp.sum(e, axis=-1, keepdims=True), approx=True)   # EUP, off the VPU path
    attn_w = e * inv                                                       # (1, 128); pad lanes exactly 0

    # attn_applied = attn_weights @ encoder_outputs
    attn_applied = jnp.dot(attn_w[:, 0:L], enc_ref[...],
                           preferred_element_type=f32)                     # (1, H)

    # --- attn_combine(cat(emb, attn_applied)) + ReLU (single fused matmul) ---
    cat2 = jnp.concatenate([emb, attn_applied], axis=1)                    # (1, 2H)
    comb = (jnp.dot(cat2, w_ref[:, LANE:2 * LANE], preferred_element_type=f32)
            + b_ref[1:2, :])                                               # (1, 128)
    x = jnp.maximum(comb[:, 0:H], 0.0)                                     # (1, H)

    # --- GRU cell: two fused (1,H)@(H,3H) matmuls, gates sliced from packed results ---
    gi = jnp.dot(x, w_ref[0:H, 2 * LANE:3 * LANE], preferred_element_type=f32)        # (1, 128)
    gh = jnp.dot(hid, w_ref[H:2 * H, 2 * LANE:3 * LANE], preferred_element_type=f32)  # (1, 128)
    s_rz = gi + gh + b_ref[2:3, :]                                         # b_r|b_z packed
    r = jax.nn.sigmoid(s_rz[:, 0:H])
    z = jax.nn.sigmoid(s_rz[:, H:2 * H])
    n = jnp.tanh(gi[:, 2 * H:3 * H] + b_ref[3:4, 0:H]
                 + r * (gh[:, 2 * H:3 * H] + b_ref[4:5, 0:H]))
    h_new = (1.0 - z) * n + z * hid                                        # (1, H)

    # --- output projection + log_softmax over the (padded) V lanes ---
    out_logits = (jnp.dot(h_new, w_ref[0:H, 3 * LANE:4 * LANE], preferred_element_type=f32)
                  + b_ref[5:6, :])                                         # (1, 128); pad lanes = -1e30
    m2 = jnp.max(out_logits, axis=-1, keepdims=True)
    lse = m2 + jnp.log(jnp.sum(jnp.exp(out_logits - m2), axis=-1, keepdims=True))
    logp = out_logits - lse                                                # (1, 128)

    # Single lane-dense store: rows = [log_probs, hidden, attn_weights]
    h_pad = jnp.concatenate([h_new, jnp.zeros((1, LANE - H), f32)], axis=1)
    out_ref[...] = jnp.concatenate([logp, h_pad, attn_w], axis=0)          # (3, 128)


def init_params(key, hidden_size=HIDDEN, output_size=VOCAB, max_length=MAX_LENGTH):
    """Deterministic synthetic parameters with PyTorch-convention shapes."""
    ks = jax.random.split(key, 11)
    s = 0.1
    p = {
        "embedding": jax.random.normal(ks[0], (output_size, hidden_size), jnp.float32) * s,
        "attn_w":    jax.random.normal(ks[1], (max_length, 2 * hidden_size), jnp.float32) * s,
        "attn_b":    jax.random.normal(ks[2], (max_length,), jnp.float32) * s,
        "comb_w":    jax.random.normal(ks[3], (hidden_size, 2 * hidden_size), jnp.float32) * s,
        "comb_b":    jax.random.normal(ks[4], (hidden_size,), jnp.float32) * s,
        "w_ih":      jax.random.normal(ks[5], (3 * hidden_size, hidden_size), jnp.float32) * s,
        "w_hh":      jax.random.normal(ks[6], (3 * hidden_size, hidden_size), jnp.float32) * s,
        "b_ih":      jax.random.normal(ks[7], (3 * hidden_size,), jnp.float32) * s,
        "b_hh":      jax.random.normal(ks[8], (3 * hidden_size,), jnp.float32) * s,
        "out_w":     jax.random.normal(ks[9], (output_size, hidden_size), jnp.float32) * s,
        "out_b":     jax.random.normal(ks[10], (output_size,), jnp.float32) * s,
    }
    return p


def pack_params(p, max_length=MAX_LENGTH):
    """One-time weight packing (done at model-load time, NOT per decode step)."""
    H = p["comb_w"].shape[0]
    V = p["embedding"].shape[0]
    L = max_length
    f32 = jnp.float32

    # Weight slab (2H, 4*128): [ attn | combine | GRU(ih ; hh) | out ], zero lane padding.
    # Weights are kept f32 so the numerical check against the f32 reference stays tight;
    # casting this slab to bf16 is a one-line switch to halve DMA bytes.
    wa = jnp.zeros((2 * H, LANE), f32).at[:, :L].set(p["attn_w"].T.astype(f32))
    wc = jnp.zeros((2 * H, LANE), f32).at[:, :H].set(p["comb_w"].T.astype(f32))
    wih = jnp.zeros((H, LANE), f32).at[:, :3 * H].set(p["w_ih"].T.astype(f32))
    whh = jnp.zeros((H, LANE), f32).at[:, :3 * H].set(p["w_hh"].T.astype(f32))
    wout = jnp.zeros((H, LANE), f32).at[:, :V].set(p["out_w"].T.astype(f32))
    wgru = jnp.concatenate([wih, whh], axis=0)
    wo2 = jnp.concatenate([wout, jnp.zeros((H, LANE), f32)], axis=0)
    wslab = jnp.concatenate([wa, wc, wgru, wo2], axis=1)                    # (2H, 512)

    # Bias slab (8, 128): rows = [attn, combine, (b_r|b_z), b_in, b_hn, out, 0, 0].
    # Padded softmax / log_softmax lanes carry -1e30 so masking is folded into the bias add.
    ba = jnp.full((LANE,), NEG, f32).at[:L].set(p["attn_b"].astype(f32))
    bc = jnp.zeros((LANE,), f32).at[:H].set(p["comb_b"].astype(f32))
    b_rz = (jnp.zeros((LANE,), f32)
            .at[:H].set(p["b_ih"][:H] + p["b_hh"][:H])
            .at[H:2 * H].set(p["b_ih"][H:2 * H] + p["b_hh"][H:2 * H]))
    b_in = jnp.zeros((LANE,), f32).at[:H].set(p["b_ih"][2 * H:])
    b_hn = jnp.zeros((LANE,), f32).at[:H].set(p["b_hh"][2 * H:])
    bo = jnp.full((LANE,), NEG, f32).at[:V].set(p["out_b"].astype(f32))
    zeros = jnp.zeros((LANE,), f32)
    bslab = jnp.stack([ba, bc, b_rz, b_in, b_hn, bo, zeros, zeros], axis=0)  # (8, 128)

    return {
        "emb": p["embedding"].astype(f32),   # (V, H) table, kept VMEM-resident in the kernel
        "wslab": wslab,
        "bslab": bslab,
        "H": H, "L": L, "V": V,
    }


def attn_decoder_forward(token, hidden, encoder_outputs, packed):
    """token: (1,) int32; hidden: (1,1,H) f32; encoder_outputs: (L,H) f32."""
    H, L, V = packed["H"], packed["L"], packed["V"]
    hid2d = hidden.reshape(1, H)

    kernel = functools.partial(_attn_decoder_kernel, H, L, V)
    full = lambda shape: pl.BlockSpec(shape, lambda i, tok: (0,) * len(shape))

    out = pl.pallas_call(
        kernel,
        out_shape=jax.ShapeDtypeStruct((3, LANE), jnp.float32),
        grid_spec=pltpu.PrefetchScalarGridSpec(
            num_scalar_prefetch=1,
            grid=(1,),
            in_specs=[
                full((V, H)),             # embedding table (resident)
                full((1, H)),             # hidden
                full((L, H)),             # encoder outputs
                full((2 * H, 4 * LANE)),  # packed weight slab (one DMA)
                full((8, LANE)),          # packed bias slab (one DMA)
            ],
            out_specs=full((3, LANE)),
        ),
        compiler_params=pltpu.CompilerParams(
            dimension_semantics=("arbitrary",)),
    )(
        token.astype(jnp.int32),
        packed["emb"], hid2d, encoder_outputs.astype(jnp.float32),
        packed["wslab"], packed["bslab"],
    )

    logp = out[0:1, :V]
    h_new = out[1:2, :H].reshape(1, 1, H)
    attn_w = out[2:3, :L]
    # TODO(synk): the full autoregressive decode loop (weights resident in VMEM across
    # steps) is out of scope for this single-step forward defined by the module.
    return logp, h_new, attn_w


def reference_forward(token, hidden, encoder_outputs, p):
    """Pure-JAX replica of the PyTorch forward (eval mode)."""
    H = hidden.shape[-1]
    emb = p["embedding"][token[0]][None, :]          # (1, H)
    hid = hidden[0]                                  # (1, H)
    cat1 = jnp.concatenate([emb, hid], axis=1)
    attn_w = jax.nn.softmax(cat1 @ p["attn_w"].T + p["attn_b"], axis=1)
    attn_applied = attn_w @ encoder_outputs
    cat2 = jnp.concatenate([emb, attn_applied], axis=1)
    x = jax.nn.relu(cat2 @ p["comb_w"].T + p["comb_b"])
    gi = x @ p["w_ih"].T + p["b_ih"]
    gh = hid @ p["w_hh"].T + p["b_hh"]
    r = jax.nn.sigmoid(gi[:, :H] + gh[:, :H])
    z = jax.nn.sigmoid(gi[:, H:2 * H] + gh[:, H:2 * H])
    n = jnp.tanh(gi[:, 2 * H:] + r * gh[:, 2 * H:])
    h_new = (1.0 - z) * n + z * hid
    logp = jax.nn.log_softmax(h_new @ p["out_w"].T + p["out_b"], axis=1)
    return logp, h_new[None], attn_w


if __name__ == "__main__":
    key = jax.random.PRNGKey(0)
    kp, kh, ke, kt = jax.random.split(key, 4)

    params = init_params(kp)
    packed = pack_params(params)      # hoisted one-time weight prep
    jax.block_until_ready(packed)

    token = jnp.array([jax.random.randint(kt, (), 0, VOCAB)], dtype=jnp.int32)   # (1,)
    hidden = jax.random.normal(kh, (1, 1, HIDDEN), jnp.float32)                  # (1,1,H)
    encoder_outputs = jax.random.normal(ke, (MAX_LENGTH, HIDDEN), jnp.float32)   # (L,H)

    logp, h_new, attn_w = attn_decoder_forward(token, hidden, encoder_outputs, packed)
    jax.block_until_ready((logp, h_new, attn_w))

    logp_ref, h_ref, aw_ref = reference_forward(token, hidden, encoder_outputs, params)
    # Tolerance is 2e-3 (not 1e-4) because the softmax denominator uses the EUP
    # approximate reciprocal (pl.reciprocal(..., approx=True)) per the perf review.
    assert jnp.allclose(logp, logp_ref, atol=2e-3), "log-prob mismatch"
    assert jnp.allclose(h_new, h_ref, atol=2e-3), "hidden mismatch"
    assert jnp.allclose(attn_w, aw_ref, atol=2e-3), "attn weight mismatch"

    print("KERNEL_OK")
</pallas_src>

<mosaic_0001>
module attributes {stable_mosaic.version = 11 : i64} {
  func.func @_attn_decoder_kernel(%arg0: i32, %arg1: memref<1xi32, #tpu.memory_space<smem>>, %arg2: memref<40x32xf32, #tpu.memory_space<vmem>>, %arg3: memref<1x32xf32, #tpu.memory_space<vmem>>, %arg4: memref<10x32xf32, #tpu.memory_space<vmem>>, %arg5: memref<64x512xf32, #tpu.memory_space<vmem>>, %arg6: memref<8x128xf32, #tpu.memory_space<vmem>>, %arg7: memref<3x128xf32, #tpu.memory_space<vmem>>) attributes {dimension_semantics = [#tpu.dimension_semantics<arbitrary>], iteration_bounds = array<i64: 1>, scalar_prefetch = 1 : i64, scratch_operands = 0 : i64, tpu.core_type = #tpu.core_type<tc>, window_params = [{pipeline_mode = #tpu.pipeline_mode<synchronous>, transform_indices = @transform_0, window_bounds = array<i64: 40, 32>}, {pipeline_mode = #tpu.pipeline_mode<synchronous>, transform_indices = @transform_1, window_bounds = array<i64: 1, 32>}, {pipeline_mode = #tpu.pipeline_mode<synchronous>, transform_indices = @transform_2, window_bounds = array<i64: 10, 32>}, {pipeline_mode = #tpu.pipeline_mode<synchronous>, transform_indices = @transform_3, window_bounds = array<i64: 64, 512>}, {pipeline_mode = #tpu.pipeline_mode<synchronous>, transform_indices = @transform_4, window_bounds = array<i64: 8, 128>}, {pipeline_mode = #tpu.pipeline_mode<synchronous>, transform_indices = @transform_5, window_bounds = array<i64: 3, 128>}]} {
    %c0 = arith.constant 0 : index
    %0 = memref.load %arg1[%c0] : memref<1xi32, #tpu.memory_space<smem>>
    %1 = tpu.iota {dimensions = array<i32: 1>} : vector<1x40xi32>
    %2 = vector.broadcast %0 : i32 to vector<1x40xi32>
    %3 = arith.cmpi eq, %1, %2 : vector<1x40xi32>
    %4 = arith.extui %3 : vector<1x40xi1> to vector<1x40xi32>
    %5 = arith.sitofp %4 : vector<1x40xi32> to vector<1x40xf32>
    %c0_0 = arith.constant 0 : index
    %c0_1 = arith.constant 0 : index
    %6 = vector.load %arg2[%c0_0, %c0_1] : memref<40x32xf32, #tpu.memory_space<vmem>>, vector<40x32xf32>
    %cst = arith.constant dense<0.000000e+00> : vector<1x32xf32>
    %7 = tpu.matmul %5, %6, %cst {dimension_numbers = #tpu.dot_dimension_numbers<[1], [0], [0], [1], [0, 0, 1, 1], [], []>} : vector<1x40xf32>, vector<40x32xf32>, vector<1x32xf32> -> vector<1x32xf32>
    %c0_2 = arith.constant 0 : index
    %c0_3 = arith.constant 0 : index
    %8 = vector.load %arg3[%c0_2, %c0_3] : memref<1x32xf32, #tpu.memory_space<vmem>>, vector<1x32xf32>
    %9 = tpu.concatenate %7, %8 in 1 : vector<1x32xf32>, vector<1x32xf32> -> vector<1x64xf32>
    %c0_4 = arith.constant 0 : index
    %c0_5 = arith.constant 0 : index
    %10 = vector.load %arg5[%c0_4, %c0_5] : memref<64x512xf32, #tpu.memory_space<vmem>>, vector<64x128xf32>
    %cst_6 = arith.constant dense<0.000000e+00> : vector<1x128xf32>
    %11 = tpu.matmul %9, %10, %cst_6 {dimension_numbers = #tpu.dot_dimension_numbers<[1], [0], [0], [1], [0, 0, 1, 1], [], []>} : vector<1x64xf32>, vector<64x128xf32>, vector<1x128xf32> -> vector<1x128xf32>
    %c0_7 = arith.constant 0 : index
    %c0_8 = arith.constant 0 : index
    %12 = vector.load %arg6[%c0_7, %c0_8] : memref<8x128xf32, #tpu.memory_space<vmem>>, vector<1x128xf32>
    %13 = arith.addf %11, %12 : vector<1x128xf32>
    %cst_9 = arith.constant dense<0xFF800000> : vector<1xf32>
    %14 = vector.multi_reduction <maximumf>, %13, %cst_9 [1] : vector<1x128xf32> to vector<1xf32>
    %15 = vector.shape_cast %14 : vector<1xf32> to vector<1x1xf32>
    %16 = vector.broadcast %15 : vector<1x1xf32> to vector<1x128xf32>
    %17 = arith.subf %13, %16 : vector<1x128xf32>
    %18 = math.exp %17 : vector<1x128xf32>
    %cst_10 = arith.constant dense<0.000000e+00> : vector<1xf32>
    %19 = vector.multi_reduction <add>, %18, %cst_10 [1] : vector<1x128xf32> to vector<1xf32>
    %20 = vector.shape_cast %19 : vector<1xf32> to vector<1x1xf32>
    %21 = tpu.reciprocal %20 {approx = true} : vector<1x1xf32> -> vector<1x1xf32>
    %22 = vector.broadcast %21 : vector<1x1xf32> to vector<1x128xf32>
    %23 = arith.mulf %18, %22 : vector<1x128xf32>
    %24 = vector.extract_strided_slice %23 {offsets = [0, 0], sizes = [1, 10], strides = [1, 1]} : vector<1x128xf32> to vector<1x10xf32>
    %c0_11 = arith.constant 0 : index
    %c0_12 = arith.constant 0 : index
    %25 = vector.load %arg4[%c0_11, %c0_12] : memref<10x32xf32, #tpu.memory_space<vmem>>, vector<10x32xf32>
    %cst_13 = arith.constant dense<0.000000e+00> : vector<1x32xf32>
    %26 = tpu.matmul %24, %25, %cst_13 {dimension_numbers = #tpu.dot_dimension_numbers<[1], [0], [0], [1], [0, 0, 1, 1], [], []>} : vector<1x10xf32>, vector<10x32xf32>, vector<1x32xf32> -> vector<1x32xf32>
    %27 = tpu.concatenate %7, %26 in 1 : vector<1x32xf32>, vector<1x32xf32> -> vector<1x64xf32>
    %c0_14 = arith.constant 0 : index
    %c128 = arith.constant 128 : index
    %28 = vector.load %arg5[%c0_14, %c128] : memref<64x512xf32, #tpu.memory_space<vmem>>, vector<64x128xf32>
    %cst_15 = arith.constant dense<0.000000e+00> : vector<1x128xf32>
    %29 = tpu.matmul %27, %28, %cst_15 {dimension_numbers = #tpu.dot_dimension_numbers<[1], [0], [0], [1], [0, 0, 1, 1], [], []>} : vector<1x64xf32>, vector<64x128xf32>, vector<1x128xf32> -> vector<1x128xf32>
    %c1 = arith.constant 1 : index
    %c0_16 = arith.constant 0 : index
    %30 = vector.load %arg6[%c1, %c0_16] : memref<8x128xf32, #tpu.memory_space<vmem>>, vector<1x128xf32>
    %31 = arith.addf %29, %30 : vector<1x128xf32>
    %32 = vector.extract_strided_slice %31 {offsets = [0, 0], sizes = [1, 32], strides = [1, 1]} : vector<1x128xf32> to vector<1x32xf32>
    %cst_17 = arith.constant 0.000000e+00 : f32
    %33 = vector.broadcast %cst_17 : f32 to vector<1x32xf32>
    %34 = arith.maximumf %32, %33 : vector<1x32xf32>
    %c0_18 = arith.constant 0 : index
    %c256 = arith.constant 256 : index
    %35 = vector.load %arg5[%c0_18, %c256] : memref<64x512xf32, #tpu.memory_space<vmem>>, vector<32x128xf32>
    %cst_19 = arith.constant dense<0.000000e+00> : vector<1x128xf32>
    %36 = tpu.matmul %34, %35, %cst_19 {dimension_numbers = #tpu.dot_dimension_numbers<[1], [0], [0], [1], [0, 0, 1, 1], [], []>} : vector<1x32xf32>, vector<32x128xf32>, vector<1x128xf32> -> vector<1x128xf32>
    %c32 = arith.constant 32 : index
    %c256_20 = arith.constant 256 : index
    %37 = vector.load %arg5[%c32, %c256_20] : memref<64x512xf32, #tpu.memory_space<vmem>>, vector<32x128xf32>
    %cst_21 = arith.constant dense<0.000000e+00> : vector<1x128xf32>
    %38 = tpu.matmul %8, %37, %cst_21 {dimension_numbers = #tpu.dot_dimension_numbers<[1], [0], [0], [1], [0, 0, 1, 1], [], []>} : vector<1x32xf32>, vector<32x128xf32>, vector<1x128xf32> -> vector<1x128xf32>
    %39 = arith.addf %36, %38 : vector<1x128xf32>
    %c2 = arith.constant 2 : index
    %c0_22 = arith.constant 0 : index
    %40 = vector.load %arg6[%c2, %c0_22] : memref<8x128xf32, #tpu.memory_space<vmem>>, vector<1x128xf32>
    %41 = arith.addf %39, %40 : vector<1x128xf32>
    %42 = vector.extract_strided_slice %41 {offsets = [0, 0], sizes = [1, 32], strides = [1, 1]} : vector<1x128xf32> to vector<1x32xf32>
    %43 = arith.negf %42 : vector<1x32xf32>
    %44 = math.exp %43 : vector<1x32xf32>
    %cst_23 = arith.constant 1.000000e+00 : f32
    %45 = vector.broadcast %cst_23 : f32 to vector<1x32xf32>
    %46 = arith.addf %45, %44 : vector<1x32xf32>
    %47 = arith.divf %45, %46 : vector<1x32xf32>
    %48 = vector.extract_strided_slice %41 {offsets = [0, 32], sizes = [1, 32], strides = [1, 1]} : vector<1x128xf32> to vector<1x32xf32>
    %49 = arith.negf %48 : vector<1x32xf32>
    %50 = math.exp %49 : vector<1x32xf32>
    %cst_24 = arith.constant 1.000000e+00 : f32
    %51 = vector.broadcast %cst_24 : f32 to vector<1x32xf32>
    %52 = arith.addf %51, %50 : vector<1x32xf32>
    %53 = arith.divf %51, %52 : vector<1x32xf32>
    %54 = vector.extract_strided_slice %36 {offsets = [0, 64], sizes = [1, 32], strides = [1, 1]} : vector<1x128xf32> to vector<1x32xf32>
    %c3 = arith.constant 3 : index
    %c0_25 = arith.constant 0 : index
    %55 = vector.load %arg6[%c3, %c0_25] : memref<8x128xf32, #tpu.memory_space<vmem>>, vector<1x32xf32>
    %56 = arith.addf %54, %55 : vector<1x32xf32>
    %57 = vector.extract_strided_slice %38 {offsets = [0, 64], sizes = [1, 32], strides = [1, 1]} : vector<1x128xf32> to vector<1x32xf32>
    %c4 = arith.constant 4 : index
    %c0_26 = arith.constant 0 : index
    %58 = vector.load %arg6[%c4, %c0_26] : memref<8x128xf32, #tpu.memory_space<vmem>>, vector<1x32xf32>
    %59 = arith.addf %57, %58 : vector<1x32xf32>
    %60 = arith.mulf %47, %59 : vector<1x32xf32>
    %61 = arith.addf %56, %60 : vector<1x32xf32>
    %62 = math.tanh %61 : vector<1x32xf32>
    %cst_27 = arith.constant 1.000000e+00 : f32
    %63 = vector.broadcast %cst_27 : f32 to vector<1x32xf32>
    %64 = arith.subf %63, %53 : vector<1x32xf32>
    %65 = arith.mulf %64, %62 : vector<1x32xf32>
    %66 = arith.mulf %53, %8 : vector<1x32xf32>
    %67 = arith.addf %65, %66 : vector<1x32xf32>
    %c0_28 = arith.constant 0 : index
    %c384 = arith.constant 384 : index
    %68 = vector.load %arg5[%c0_28, %c384] : memref<64x512xf32, #tpu.memory_space<vmem>>, vector<32x128xf32>
    %cst_29 = arith.constant dense<0.000000e+00> : vector<1x128xf32>
    %69 = tpu.matmul %67, %68, %cst_29 {dimension_numbers = #tpu.dot_dimension_numbers<[1], [0], [0], [1], [0, 0, 1, 1], [], []>} : vector<1x32xf32>, vector<32x128xf32>, vector<1x128xf32> -> vector<1x128xf32>
    %c5 = arith.constant 5 : index
    %c0_30 = arith.constant 0 : index
    %70 = vector.load %arg6[%c5, %c0_30] : memref<8x128xf32, #tpu.memory_space<vmem>>, vector<1x128xf32>
    %71 = arith.addf %69, %70 : vector<1x128xf32>
    %cst_31 = arith.constant dense<0xFF800000> : vector<1xf32>
    %72 = vector.multi_reduction <maximumf>, %71, %cst_31 [1] : vector<1x128xf32> to vector<1xf32>
    %73 = vector.shape_cast %72 : vector<1xf32> to vector<1x1xf32>
    %74 = vector.broadcast %73 : vector<1x1xf32> to vector<1x128xf32>
    %75 = arith.subf %71, %74 : vector<1x128xf32>
    %76 = math.exp %75 : vector<1x128xf32>
    %cst_32 = arith.constant dense<0.000000e+00> : vector<1xf32>
    %77 = vector.multi_reduction <add>, %76, %cst_32 [1] : vector<1x128xf32> to vector<1xf32>
    %78 = vector.shape_cast %77 : vector<1xf32> to vector<1x1xf32>
    %79 = math.log %78 : vector<1x1xf32>
    %80 = arith.addf %73, %79 : vector<1x1xf32>
    %81 = vector.broadcast %80 : vector<1x1xf32> to vector<1x128xf32>
    %82 = arith.subf %71, %81 : vector<1x128xf32>
    %cst_33 = arith.constant 0.000000e+00 : f32
    %83 = vector.broadcast %cst_33 : f32 to vector<1x96xf32>
    %84 = tpu.concatenate %67, %83 in 1 : vector<1x32xf32>, vector<1x96xf32> -> vector<1x128xf32>
    %85 = tpu.concatenate %82, %84, %23 in 0 : vector<1x128xf32>, vector<1x128xf32>, vector<1x128xf32> -> vector<3x128xf32>
    %c0_34 = arith.constant 0 : index
    %c0_35 = arith.constant 0 : index
    %86 = vector.load %arg7[%c0_34, %c0_35] : memref<3x128xf32, #tpu.memory_space<vmem>>, vector<3x128xf32>
    tpu.vector_store %arg7[%c0_34, %c0_35], %85 {strides = array<i32>} : memref<3x128xf32, #tpu.memory_space<vmem>>, vector<3x128xf32>,
    return
  }
  func.func @transform_0(%arg0: i32, %arg1: memref<1xi32, #tpu.memory_space<smem>>) -> (i32, i32) {
    %c0_i32 = arith.constant 0 : i32
    %c0_i32_0 = arith.constant 0 : i32
    %c0_i32_1 = arith.constant 0 : i32
    return %c0_i32, %c0_i32_0 : i32, i32
  }
  func.func @transform_1(%arg0: i32, %arg1: memref<1xi32, #tpu.memory_space<smem>>) -> (i32, i32) {
    %c0_i32 = arith.constant 0 : i32
    %c0_i32_0 = arith.constant 0 : i32
    %c0_i32_1 = arith.constant 0 : i32
    return %c0_i32, %c0_i32_0 : i32, i32
  }
  func.func @transform_2(%arg0: i32, %arg1: memref<1xi32, #tpu.memory_space<smem>>) -> (i32, i32) {
    %c0_i32 = arith.constant 0 : i32
    %c0_i32_0 = arith.constant 0 : i32
    %c0_i32_1 = arith.constant 0 : i32
    return %c0_i32, %c0_i32_0 : i32, i32
  }
  func.func @transform_3(%arg0: i32, %arg1: memref<1xi32, #tpu.memory_space<smem>>) -> (i32, i32) {
    %c0_i32 = arith.constant 0 : i32
    %c0_i32_0 = arith.constant 0 : i32
    %c0_i32_1 = arith.constant 0 : i32
    return %c0_i32, %c0_i32_0 : i32, i32
  }
  func.func @transform_4(%arg0: i32, %arg1: memref<1xi32, #tpu.memory_space<smem>>) -> (i32, i32) {
    %c0_i32 = arith.constant 0 : i32
    %c0_i32_0 = arith.constant 0 : i32
    %c0_i32_1 = arith.constant 0 : i32
    return %c0_i32, %c0_i32_0 : i32, i32
  }
  func.func @transform_5(%arg0: i32, %arg1: memref<1xi32, #tpu.memory_space<smem>>) -> (i32, i32) {
    %c0_i32 = arith.constant 0 : i32
    %c0_i32_0 = arith.constant 0 : i32
    %c0_i32_1 = arith.constant 0 : i32
    return %c0_i32, %c0_i32_0 : i32, i32
  }
}

</mosaic_0001>

<llo_original>
// kernel: tpu_custom_call.1
$region0: #{tpu_custom_call.1}
  #allocation0 [shape = 'u32[]', space=smem, size = 0x4, offset = 0x4, fixed_abs, tag = 'smem constant byte address 0x4 - core index']
  #allocation1 [shape = 'u32[144,128]{1,0:T(1,128)}', space=vmem, size = 0x12000, scoped, tag = 'internal scratch']
  #allocation2 [shape = 's32[1]{0}', space=sflag, size = 0x4, scoped, tag = 'scoped memory for tpu_custom_call.1']
  #allocation3 [shape = 's32[1]{0:T(128)S(6)}', space=smem, size = 0x200, scoped, tag = 'prefetched SMEM operand 0']
  %s0 = inlined_call_operand.<no memory space> [shape: s32[1], index: 0, kind: input, shape index: {}]
  %s1 = inlined_call_operand.vmem [shape: f32[40,32], index: 1, kind: input, shape index: {}]
  %s2 = inlined_call_operand.vmem [shape: f32[1,32], index: 2, kind: input, shape index: {}]
  %s3 = inlined_call_operand.vmem [shape: f32[10,32], index: 3, kind: input, shape index: {}]
  %s4 = inlined_call_operand.hbm [shape: f32[64,512], index: 4, kind: input, shape index: {}]
  %s5 = inlined_call_operand.vmem [shape: f32[8,128], index: 5, kind: input, shape index: {}]
  %s6 = inlined_call_operand.hbm [shape: f32[3,128], index: 6, kind: output, shape index: {}]
  %s7 = sld [smem:[#allocation0]]
  $region34: #{tpu_custom_call.1} parent=0
    _
  %s9 = ssub.s32 1, %s7
  %s10 = scalar_select 0, %s9, %s7
  %11 = sst [smem:[#allocation3]] %s0
  $region1: #{tpu_custom_call.1} parent=0
    #allocation4 [shape = 'u8[131072]{0}', space=vmem, size = 0x20000, scoped, tag = 'input window, operand 4, single buffered']
    #allocation5 [shape = 's32[1]{0}', space=sflag, size = 0x4, scoped, tag = 'scoped memory for tpu_custom_call.1']
    #allocation6 [shape = 's32[1]{0}', space=sflag, size = 0x4, scoped, tag = 'scoped memory for tpu_custom_call.1']
    #allocation7 [shape = 'u8[2048]{0}', space=vmem, size = 0x800, scoped, tag = 'output window, operand 0, single buffered']
    %12 = vsyncpa [#allocation5], 0
    %13 = vsyncpa [#allocation6], 0
    // Predicated region
    $region2: #{tpu_custom_call.1} parent=1 // pred_check
      _
    $region3: #{tpu_custom_call.1} parent=1 // pred_check_branch
      %15 = sbr.rel (0) target = $region5
    $region4: #{tpu_custom_call.1} parent=1 // pred_region
      _
    $region5: #{tpu_custom_call.1} parent=1 // pred_fallthru
      _
    // Predicated region
    $region6: #{tpu_custom_call.1} parent=1 // pred_check
      _
    $region7: #{tpu_custom_call.1} parent=1 // pred_check_branch
      %17 = sbr.rel (0) target = $region9
    $region8: #{tpu_custom_call.1} parent=1 // pred_region
      _
    $region9: #{tpu_custom_call.1} parent=1 // pred_fallthru
      _
    // Predicated region
    $region10: #{tpu_custom_call.1} parent=1 // pred_check
      _
    $region11: #{tpu_custom_call.1} parent=1 // pred_check_branch
      %19 = sbr.rel (0) target = $region13
    $region12: #{tpu_custom_call.1} parent=1 // pred_region
      _
    $region13: #{tpu_custom_call.1} parent=1 // pred_fallthru
      _
    // Predicated region
    $region14: #{tpu_custom_call.1} parent=1 // pred_check
      _
    $region15: #{tpu_custom_call.1} parent=1 // pred_check_branch
      %21 = sbr.rel (0) target = $region17
    $region16: #{tpu_custom_call.1} parent=1 // pred_region
      %s23 = ssub.s32 4096, 4096
      %24 = vsyncadd [#allocation5], %s23
      %s25 = sshll.u32 [#allocation4], 4
      %s26 = int_to_ptr.vmem [resolvable:$true] %s25
      %31 = dma.hbm_to_vmem [thread:$0]  %s4, 4096, %s26, [#allocation5], 512, 512, 32
    $region17: #{tpu_custom_call.1} parent=1 // pred_fallthru
      _
    // Predicated region
    $region18: #{tpu_custom_call.1} parent=1 // pred_check
      _
    $region19: #{tpu_custom_call.1} parent=1 // pred_check_branch
      %33 = sbr.rel (0) target = $region21
    $region20: #{tpu_custom_call.1} parent=1 // pred_region
      _
    $region21: #{tpu_custom_call.1} parent=1 // pred_fallthru
      _
    // Predicated region
    $region22: #{tpu_custom_call.1} parent=1 // pred_check
      _
    $region23: #{tpu_custom_call.1} parent=1 // pred_check_branch
      %35 = sbr.rel (0) target = $region25
    $region24: #{tpu_custom_call.1} parent=1 // pred_region
      %36 = dma.done [#allocation5], 4096
    $region25: #{tpu_custom_call.1} parent=1 // pred_fallthru
      _
    %s37 = sld [smem:[#allocation3]]
    %v38 = vlaneseq
    %v39 = vand.u32 %v38, 127
    %v40 = vstv %s37
    %vm41 = vcmp.eq.s32.totalorder %v39, %v40
    %v42 = vsel %vm41, 1, 0
    %v43 = vcvt.s32.f32 %v42
    %v44 = vld [vmem:[%s1] sm:$0xff]
    %v45 = vld [vmem:[%s1 + $0x8] sm:$0xff]
    %v46 = vld [vmem:[%s1 + $0x10] sm:$0xff]
    %v47 = vld [vmem:[%s1 + $0x18] sm:$0xff]
    %v48 = vld [vmem:[%s1 + $0x20] sm:$0xff]
    %vm49 = vcmask 326656
    %v51 = vsel %vm49, %v43, 0
    %53 = vmatprep.subr.mxu0 0.0
    %54 = vmatpush1.msra.mxu0 %v44
    %55 = vmatprep.subr.mxu0 0.0
    %56 = vmatpush1.msra.mxu0 %v45
    %57 = vmatprep.subr.mxu0 0.0
    %58 = vmatpush1.msra.mxu0 %v46
    %59 = vmatprep.subr.mxu0 0.0
    %60 = vmatpush1.msra.mxu0 %v47
    %61 = vmatprep.subr.mxu0 0.0
    %62 = vmatpush1.msra.mxu0 %v48
    %63 = vmatprep.subr.mxu0 0.0
    %64 = vmatpush1.msra.mxu0 0.0
    %65 = vmatprep.subr.mxu0 0.0
    %66 = vmatpush1.msra.mxu0 0.0
    %67 = vmatprep.subr.mxu0 0.0
    %68 = vmatpush1.msra.mxu0 0.0
    %69 = vmatprep.subr.mxu0 0.0
    %70 = vmatpush1.msra.mxu0 0.0
    %71 = vmatprep.subr.mxu0 0.0
    %72 = vmatpush1.msra.mxu0 0.0
    %73 = vmatprep.subr.mxu0 0.0
    %74 = vmatpush1.msra.mxu0 0.0
    %75 = vmatprep.subr.mxu0 0.0
    %76 = vmatpush1.msra.mxu0 0.0
    %77 = vmatprep.subr.mxu0 0.0
    %78 = vmatpush1.msra.mxu0 0.0
    %79 = vmatprep.subr.mxu0 0.0
    %80 = vmatpush1.msra.mxu0 0.0
    %81 = vmatprep.subr.mxu0 0.0
    %82 = vmatpush1.msra.mxu0 0.0
    %83 = vmatprep.subr.mxu0 0.0
    %84 = vmatpush1.msra.mxu0 0.0
    %85 = vmatprep.subr.mxu0 0.0
    %86 = vmatpush1.msra.mxu0 0.0
    %87 = vmatprep.subr.mxu0 0.0
    %88 = vmatpush1.msra.mxu0 0.0
    %89 = vmatprep.subr.mxu0 0.0
    %90 = vmatpush1.msra.mxu0 0.0
    %91 = vmatprep.subr.mxu0 0.0
    %92 = vmatpush1.msra.mxu0 0.0
    %93 = vmatprep.subr.mxu0 0.0
    %94 = vmatpush1.msra.mxu0 0.0
    %95 = vmatprep.subr.mxu0 0.0
    %96 = vmatpush1.msra.mxu0 0.0
    %97 = vmatprep.subr.mxu0 0.0
    %98 = vmatpush1.msra.mxu0 0.0
    %99 = vmatprep.subr.mxu0 0.0
    %100 = vmatpush1.msra.mxu0 0.0
    %101 = vmatprep.subr.mxu0 0.0
    %102 = vmatpush1.msra.mxu0 0.0
    %103 = vmatprep.subr.mxu0 0.0
    %104 = vmatpush1.msra.mxu0 0.0
    %105 = vmatprep.subr.mxu0 0.0
    %106 = vmatpush1.msra.mxu0 0.0
    %107 = vmatprep.subr.mxu0 0.0
    %108 = vmatpush1.msra.mxu0 0.0
    %109 = vmatprep.subr.mxu0 0.0
    %110 = vmatpush1.msra.mxu0 0.0
    %111 = vmatprep.subr.mxu0 0.0
    %112 = vmatpush1.msra.mxu0 0.0
    %113 = vmatprep.subr.mxu0 0.0
    %114 = vmatpush1.msra.mxu0 0.0
    %115 = vmatprep.subr.mxu0 0.0
    %116 = vmatpush1.msra.mxu0 0.0
    %117 = vmatprep.mubr.f32.mxu0 0.0
    %118 = vmatmul.mubr.f32.gmra.mrb[0].mxu0 %v51
    %v119 = vpop.f32.mrb[0].mxu0
    %v120 = vadd.f32 0.0, %v119
    %v121 = vpop.f32.mrb[0].mxu0
    %122 = vdwg.mxu0
    %v123 = vld [vmem:[%s2] sm:$0x1]
    %v125 = vlaneseq
    %v126 = vshrl.u32 %v125, 7
    %v127 = vsub.s32 0, %v126
    %v128 = vrot.slane %v123, %v127
    %129 = vrot.lane.b32.xlu0 %v128, 32
    %v130 = vpop.permute.xlu0 %129
    %vm132 = vcmask 261120
    %v133 = vsel %vm132, %v120, %v130
    %v134 = vld [vmem:[#allocation4] sm:$0xff]
    %v135 = vld [vmem:[#allocation4 + $0x20] sm:$0xff]
    %v136 = vld [vmem:[#allocation4 + $0x40] sm:$0xff]
    %v137 = vld [vmem:[#allocation4 + $0x60] sm:$0xff]
    %v138 = vld [vmem:[#allocation4 + $0x80] sm:$0xff]
    %v139 = vld [vmem:[#allocation4 + $0xa0] sm:$0xff]
    %v140 = vld [vmem:[#allocation4 + $0xc0] sm:$0xff]
    %v141 = vld [vmem:[#allocation4 + $0xe0] sm:$0xff]
    %v142 = vld [vmem:[%s5] sm:$0x1]
    %vm143 = vcmask 523264
    %v145 = vsel %vm143, %v133, 0
    %147 = vmatprep.subr.mxu0 0.0
    %148 = vmatpush1.msra.mxu0 %v134
    %149 = vmatprep.subr.mxu0 0.0
    %150 = vmatpush1.msra.mxu0 %v135
    %151 = vmatprep.subr.mxu0 0.0
    %152 = vmatpush1.msra.mxu0 %v136
    %153 = vmatprep.subr.mxu0 0.0
    %154 = vmatpush1.msra.mxu0 %v137
    %155 = vmatprep.subr.mxu0 0.0
    %156 = vmatpush1.msra.mxu0 %v138
    %157 = vmatprep.subr.mxu0 0.0
    %158 = vmatpush1.msra.mxu0 %v139
    %159 = vmatprep.subr.mxu0 0.0
    %160 = vmatpush1.msra.mxu0 %v140
    %161 = vmatprep.subr.mxu0 0.0
    %162 = vmatpush1.msra.mxu0 %v141
    %163 = vmatprep.subr.mxu0 0.0
    %164 = vmatpush1.msra.mxu0 0.0
    %165 = vmatprep.subr.mxu0 0.0
    %166 = vmatpush1.msra.mxu0 0.0
    %167 = vmatprep.subr.mxu0 0.0
    %168 = vmatpush1.msra.mxu0 0.0
    %169 = vmatprep.subr.mxu0 0.0
    %170 = vmatpush1.msra.mxu0 0.0
    %171 = vmatprep.subr.mxu0 0.0
    %172 = vmatpush1.msra.mxu0 0.0
    %173 = vmatprep.subr.mxu0 0.0
    %174 = vmatpush1.msra.mxu0 0.0
    %175 = vmatprep.subr.mxu0 0.0
    %176 = vmatpush1.msra.mxu0 0.0
    %177 = vmatprep.subr.mxu0 0.0
    %178 = vmatpush1.msra.mxu0 0.0
    %179 = vmatprep.subr.mxu0 0.0
    %180 = vmatpush1.msra.mxu0 0.0
    %181 = vmatprep.subr.mxu0 0.0
    %182 = vmatpush1.msra.mxu0 0.0
    %183 = vmatprep.subr.mxu0 0.0
    %184 = vmatpush1.msra.mxu0 0.0
    %185 = vmatprep.subr.mxu0 0.0
    %186 = vmatpush1.msra.mxu0 0.0
    %187 = vmatprep.subr.mxu0 0.0
    %188 = vmatpush1.msra.mxu0 0.0
    %189 = vmatprep.subr.mxu0 0.0
    %190 = vmatpush1.msra.mxu0 0.0
    %191 = vmatprep.subr.mxu0 0.0
    %192 = vmatpush1.msra.mxu0 0.0
    %193 = vmatprep.subr.mxu0 0.0
    %194 = vmatpush1.msra.mxu0 0.0
    %195 = vmatprep.subr.mxu0 0.0
    %196 = vmatpush1.msra.mxu0 0.0
    %197 = vmatprep.subr.mxu0 0.0
    %198 = vmatpush1.msra.mxu0 0.0
    %199 = vmatprep.subr.mxu0 0.0
    %200 = vmatpush1.msra.mxu0 0.0
    %201 = vmatprep.subr.mxu0 0.0
    %202 = vmatpush1.msra.mxu0 0.0
    %203 = vmatprep.subr.mxu0 0.0
    %204 = vmatpush1.msra.mxu0 0.0
    %205 = vmatprep.subr.mxu0 0.0
    %206 = vmatpush1.msra.mxu0 0.0
    %207 = vmatprep.subr.mxu0 0.0
    %208 = vmatpush1.msra.mxu0 0.0
    %209 = vmatprep.subr.mxu0 0.0
    %210 = vmatpush1.msra.mxu0 0.0
    %211 = vmatprep.mubr.f32.mxu0 0.0
    %212 = vmatmul.mubr.f32.gmra.mrb[0].mxu0 %v145
    %v213 = vpop.f32.mrb[0].mxu0
    %v214 = vadd.f32 %v142, %v213
    %v215 = vpop.f32.mrb[0].mxu0
    %216 = vdwg.mxu0
    %vm217 = vcmask 1040384
    %v218 = vsel %vm217, %v214, -inf
    %219 = vmax.xlane.f32.xlu0 %v218
    %v220 = vpop.xlane.xlu0 %219
    %v221 = vsub.f32 %v214, %v220
    %v222 = vmul.f32 %v221, 1.442695
    %v223 = vpow.pop %v222
    %v224 = vsel %vm217, %v223, 0.0
    %225 = vadd.xlane.f32.xlu0 %v224
    %v226 = vpop.xlane.xlu0 %225
    %v227 = vrcp.pop %v226
    %v228 = vmul.f32 %v223, %v227
    %v229 = vld [vmem:[%s3] sm:$0xff]
    %v230 = vld [vmem:[%s3 + $0x8] sm:$0x3]
    %vm231 = vcmask 80896
    %v233 = vsel %vm231, %v228, 0
    %vm235 = vcmask 1041408
    %v237 = vsel %vm235, %v230, 0
    %239 = vmatprep.subr.mxu0 0.0
    %240 = vmatpush1.msra.mxu0 %v229
    %241 = vmatprep.subr.mxu0 0.0
    %242 = vmatpush1.msra.mxu0 %v237
    %243 = vmatprep.subr.mxu0 0.0
    %244 = vmatpush1.msra.mxu0 0.0
    %245 = vmatprep.subr.mxu0 0.0
    %246 = vmatpush1.msra.mxu0 0.0
    %247 = vmatprep.subr.mxu0 0.0
    %248 = vmatpush1.msra.mxu0 0.0
    %249 = vmatprep.subr.mxu0 0.0
    %250 = vmatpush1.msra.mxu0 0.0
    %251 = vmatprep.subr.mxu0 0.0
    %252 = vmatpush1.msra.mxu0 0.0
    %253 = vmatprep.subr.mxu0 0.0
    %254 = vmatpush1.msra.mxu0 0.0
    %255 = vmatprep.subr.mxu0 0.0
    %256 = vmatpush1.msra.mxu0 0.0
    %257 = vmatprep.subr.mxu0 0.0
    %258 = vmatpush1.msra.mxu0 0.0
    %259 = vmatprep.subr.mxu0 0.0
    %260 = vmatpush1.msra.mxu0 0.0
    %261 = vmatprep.subr.mxu0 0.0
    %262 = vmatpush1.msra.mxu0 0.0
    %263 = vmatprep.subr.mxu0 0.0
    %264 = vmatpush1.msra.mxu0 0.0
    %265 = vmatprep.subr.mxu0 0.0
    %266 = vmatpush1.msra.mxu0 0.0
    %267 = vmatprep.subr.mxu0 0.0
    %268 = vmatpush1.msra.mxu0 0.0
    %269 = vmatprep.subr.mxu0 0.0
    %270 = vmatpush1.msra.mxu0 0.0
    %271 = vmatprep.subr.mxu0 0.0
    %272 = vmatpush1.msra.mxu0 0.0
    %273 = vmatprep.subr.mxu0 0.0
    %274 = vmatpush1.msra.mxu0 0.0
    %275 = vmatprep.subr.mxu0 0.0
    %276 = vmatpush1.msra.mxu0 0.0
    %277 = vmatprep.subr.mxu0 0.0
    %278 = vmatpush1.msra.mxu0 0.0
    %279 = vmatprep.subr.mxu0 0.0
    %280 = vmatpush1.msra.mxu0 0.0
    %281 = vmatprep.subr.mxu0 0.0
    %282 = vmatpush1.msra.mxu0 0.0
    %283 = vmatprep.subr.mxu0 0.0
    %284 = vmatpush1.msra.mxu0 0.0
    %285 = vmatprep.subr.mxu0 0.0
    %286 = vmatpush1.msra.mxu0 0.0
    %287 = vmatprep.subr.mxu0 0.0
    %288 = vmatpush1.msra.mxu0 0.0
    %289 = vmatprep.subr.mxu0 0.0
    %290 = vmatpush1.msra.mxu0 0.0
    %291 = vmatprep.subr.mxu0 0.0
    %292 = vmatpush1.msra.mxu0 0.0
    %293 = vmatprep.subr.mxu0 0.0
    %294 = vmatpush1.msra.mxu0 0.0
    %295 = vmatprep.subr.mxu0 0.0
    %296 = vmatpush1.msra.mxu0 0.0
    %297 = vmatprep.subr.mxu0 0.0
    %298 = vmatpush1.msra.mxu0 0.0
    %299 = vmatprep.subr.mxu0 0.0
    %300 = vmatpush1.msra.mxu0 0.0
    %301 = vmatprep.subr.mxu0 0.0
    %302 = vmatpush1.msra.mxu0 0.0
    %303 = vmatprep.mubr.f32.mxu0 0.0
    %304 = vmatmul.mubr.f32.gmra.mrb[0].mxu0 %v233
    %v305 = vpop.f32.mrb[0].mxu0
    %v306 = vadd.f32 0.0, %v305
    %v307 = vpop.f32.mrb[0].mxu0
    %308 = vdwg.mxu0
    %310 = vrot.lane.b32.xlu0 %v306, 32
    %v311 = vpop.permute.xlu0 %310
    %v313 = vsel %vm132, %v120, %v311
    %v314 = vld [vmem:[#allocation4 + $0x8] sm:$0xff]
    %v315 = vld [vmem:[#allocation4 + $0x28] sm:$0xff]
    %v316 = vld [vmem:[#allocation4 + $0x48] sm:$0xff]
    %v317 = vld [vmem:[#allocation4 + $0x68] sm:$0xff]
    %v318 = vld [vmem:[#allocation4 + $0x88] sm:$0xff]
    %v319 = vld [vmem:[#allocation4 + $0xa8] sm:$0xff]
    %v320 = vld [vmem:[#allocation4 + $0xc8] sm:$0xff]
    %v321 = vld [vmem:[#allocation4 + $0xe8] sm:$0xff]
    %v322 = vld [vmem:[%s5 + $0x1] sm:$0x1]
    %v324 = vsel %vm143, %v313, 0
    %326 = vmatprep.subr.mxu0 0.0
    %327 = vmatpush1.msra.mxu0 %v314
    %328 = vmatprep.subr.mxu0 0.0
    %329 = vmatpush1.msra.mxu0 %v315
    %330 = vmatprep.subr.mxu0 0.0
    %331 = vmatpush1.msra.mxu0 %v316
    %332 = vmatprep.subr.mxu0 0.0
    %333 = vmatpush1.msra.mxu0 %v317
    %334 = vmatprep.subr.mxu0 0.0
    %335 = vmatpush1.msra.mxu0 %v318
    %336 = vmatprep.subr.mxu0 0.0
    %337 = vmatpush1.msra.mxu0 %v319
    %338 = vmatprep.subr.mxu0 0.0
    %339 = vmatpush1.msra.mxu0 %v320
    %340 = vmatprep.subr.mxu0 0.0
    %341 = vmatpush1.msra.mxu0 %v321
    %342 = vmatprep.subr.mxu0 0.0
    %343 = vmatpush1.msra.mxu0 0.0
    %344 = vmatprep.subr.mxu0 0.0
    %345 = vmatpush1.msra.mxu0 0.0
    %346 = vmatprep.subr.mxu0 0.0
    %347 = vmatpush1.msra.mxu0 0.0
    %348 = vmatprep.subr.mxu0 0.0
    %349 = vmatpush1.msra.mxu0 0.0
    %350 = vmatprep.subr.mxu0 0.0
    %351 = vmatpush1.msra.mxu0 0.0
    %352 = vmatprep.subr.mxu0 0.0
    %353 = vmatpush1.msra.mxu0 0.0
    %354 = vmatprep.subr.mxu0 0.0
    %355 = vmatpush1.msra.mxu0 0.0
    %356 = vmatprep.subr.mxu0 0.0
    %357 = vmatpush1.msra.mxu0 0.0
    %358 = vmatprep.subr.mxu0 0.0
    %359 = vmatpush1.msra.mxu0 0.0
    %360 = vmatprep.subr.mxu0 0.0
    %361 = vmatpush1.msra.mxu0 0.0
    %362 = vmatprep.subr.mxu0 0.0
    %363 = vmatpush1.msra.mxu0 0.0
    %364 = vmatprep.subr.mxu0 0.0
    %365 = vmatpush1.msra.mxu0 0.0
    %366 = vmatprep.subr.mxu0 0.0
    %367 = vmatpush1.msra.mxu0 0.0
    %368 = vmatprep.subr.mxu0 0.0
    %369 = vmatpush1.msra.mxu0 0.0
    %370 = vmatprep.subr.mxu0 0.0
    %371 = vmatpush1.msra.mxu0 0.0
    %372 = vmatprep.subr.mxu0 0.0
    %373 = vmatpush1.msra.mxu0 0.0
    %374 = vmatprep.subr.mxu0 0.0
    %375 = vmatpush1.msra.mxu0 0.0
    %376 = vmatprep.subr.mxu0 0.0
    %377 = vmatpush1.msra.mxu0 0.0
    %378 = vmatprep.subr.mxu0 0.0
    %379 = vmatpush1.msra.mxu0 0.0
    %380 = vmatprep.subr.mxu0 0.0
    %381 = vmatpush1.msra.mxu0 0.0
    %382 = vmatprep.subr.mxu0 0.0
    %383 = vmatpush1.msra.mxu0 0.0
    %384 = vmatprep.subr.mxu0 0.0
    %385 = vmatpush1.msra.mxu0 0.0
    %386 = vmatprep.subr.mxu0 0.0
    %387 = vmatpush1.msra.mxu0 0.0
    %388 = vmatprep.subr.mxu0 0.0
    %389 = vmatpush1.msra.mxu0 0.0
    %390 = vmatprep.mubr.f32.mxu0 0.0
    %391 = vmatmul.mubr.f32.gmra.mrb[0].mxu0 %v324
    %v392 = vpop.f32.mrb[0].mxu0
    %v393 = vadd.f32 %v322, %v392
    %v394 = vpop.f32.mrb[0].mxu0
    %395 = vdwg.mxu0
    %v396 = vmax.f32 %v393, 0.0
    %v397 = vld [vmem:[#allocation4 + $0x10] sm:$0xff]
    %v398 = vld [vmem:[#allocation4 + $0x30] sm:$0xff]
    %v399 = vld [vmem:[#allocation4 + $0x50] sm:$0xff]
    %v400 = vld [vmem:[#allocation4 + $0x70] sm:$0xff]
    %v402 = vsel %vm132, %v396, 0
    %404 = vmatprep.subr.mxu0 0.0
    %405 = vmatpush1.msra.mxu0 %v397
    %406 = vmatprep.subr.mxu0 0.0
    %407 = vmatpush1.msra.mxu0 %v398
    %408 = vmatprep.subr.mxu0 0.0
    %409 = vmatpush1.msra.mxu0 %v399
    %410 = vmatprep.subr.mxu0 0.0
    %411 = vmatpush1.msra.mxu0 %v400
    %412 = vmatprep.subr.mxu0 0.0
    %413 = vmatpush1.msra.mxu0 0.0
    %414 = vmatprep.subr.mxu0 0.0
    %415 = vmatpush1.msra.mxu0 0.0
    %416 = vmatprep.subr.mxu0 0.0
    %417 = vmatpush1.msra.mxu0 0.0
    %418 = vmatprep.subr.mxu0 0.0
    %419 = vmatpush1.msra.mxu0 0.0
    %420 = vmatprep.subr.mxu0 0.0
    %421 = vmatpush1.msra.mxu0 0.0
    %422 = vmatprep.subr.mxu0 0.0
    %423 = vmatpush1.msra.mxu0 0.0
    %424 = vmatprep.subr.mxu0 0.0
    %425 = vmatpush1.msra.mxu0 0.0
    %426 = vmatprep.subr.mxu0 0.0
    %427 = vmatpush1.msra.mxu0 0.0
    %428 = vmatprep.subr.mxu0 0.0
    %429 = vmatpush1.msra.mxu0 0.0
    %430 = vmatprep.subr.mxu0 0.0
    %431 = vmatpush1.msra.mxu0 0.0
    %432 = vmatprep.subr.mxu0 0.0
    %433 = vmatpush1.msra.mxu0 0.0
    %434 = vmatprep.subr.mxu0 0.0
    %435 = vmatpush1.msra.mxu0 0.0
    %436 = vmatprep.subr.mxu0 0.0
    %437 = vmatpush1.msra.mxu0 0.0
    %438 = vmatprep.subr.mxu0 0.0
    %439 = vmatpush1.msra.mxu0 0.0
    %440 = vmatprep.subr.mxu0 0.0
    %441 = vmatpush1.msra.mxu0 0.0
    %442 = vmatprep.subr.mxu0 0.0
    %443 = vmatpush1.msra.mxu0 0.0
    %444 = vmatprep.subr.mxu0 0.0
    %445 = vmatpush1.msra.mxu0 0.0
    %446 = vmatprep.subr.mxu0 0.0
    %447 = vmatpush1.msra.mxu0 0.0
    %448 = vmatprep.subr.mxu0 0.0
    %449 = vmatpush1.msra.mxu0 0.0
    %450 = vmatprep.subr.mxu0 0.0
    %451 = vmatpush1.msra.mxu0 0.0
    %452 = vmatprep.subr.mxu0 0.0
    %453 = vmatpush1.msra.mxu0 0.0
    %454 = vmatprep.subr.mxu0 0.0
    %455 = vmatpush1.msra.mxu0 0.0
    %456 = vmatprep.subr.mxu0 0.0
    %457 = vmatpush1.msra.mxu0 0.0
    %458 = vmatprep.subr.mxu0 0.0
    %459 = vmatpush1.msra.mxu0 0.0
    %460 = vmatprep.subr.mxu0 0.0
    %461 = vmatpush1.msra.mxu0 0.0
    %462 = vmatprep.subr.mxu0 0.0
    %463 = vmatpush1.msra.mxu0 0.0
    %464 = vmatprep.subr.mxu0 0.0
    %465 = vmatpush1.msra.mxu0 0.0
    %466 = vmatprep.subr.mxu0 0.0
    %467 = vmatpush1.msra.mxu0 0.0
    %468 = vmatprep.mubr.f32.mxu0 0.0
    %469 = vmatmul.mubr.f32.gmra.mrb[0].mxu0 %v402
    %v470 = vpop.f32.mrb[0].mxu0
    %v471 = vadd.f32 0.0, %v470
    %v472 = vpop.f32.mrb[0].mxu0
    %473 = vdwg.mxu0
    %v474 = vld [vmem:[#allocation4 + $0x90] sm:$0xff]
    %v475 = vld [vmem:[#allocation4 + $0xb0] sm:$0xff]
    %v476 = vld [vmem:[#allocation4 + $0xd0] sm:$0xff]
    %v477 = vld [vmem:[#allocation4 + $0xf0] sm:$0xff]
    %v478 = vsel %vm132, %v123, 0
    %480 = vmatprep.subr.mxu0 0.0
    %481 = vmatpush1.msra.mxu0 %v474
    %482 = vmatprep.subr.mxu0 0.0
    %483 = vmatpush1.msra.mxu0 %v475
    %484 = vmatprep.subr.mxu0 0.0
    %485 = vmatpush1.msra.mxu0 %v476
    %486 = vmatprep.subr.mxu0 0.0
    %487 = vmatpush1.msra.mxu0 %v477
    %488 = vmatprep.subr.mxu0 0.0
    %489 = vmatpush1.msra.mxu0 0.0
    %490 = vmatprep.subr.mxu0 0.0
    %491 = vmatpush1.msra.mxu0 0.0
    %492 = vmatprep.subr.mxu0 0.0
    %493 = vmatpush1.msra.mxu0 0.0
    %494 = vmatprep.subr.mxu0 0.0
    %495 = vmatpush1.msra.mxu0 0.0
    %496 = vmatprep.subr.mxu0 0.0
    %497 = vmatpush1.msra.mxu0 0.0
    %498 = vmatprep.subr.mxu0 0.0
    %499 = vmatpush1.msra.mxu0 0.0
    %500 = vmatprep.subr.mxu0 0.0
    %501 = vmatpush1.msra.mxu0 0.0
    %502 = vmatprep.subr.mxu0 0.0
    %503 = vmatpush1.msra.mxu0 0.0
    %504 = vmatprep.subr.mxu0 0.0
    %505 = vmatpush1.msra.mxu0 0.0
    %506 = vmatprep.subr.mxu0 0.0
    %507 = vmatpush1.msra.mxu0 0.0
    %508 = vmatprep.subr.mxu0 0.0
    %509 = vmatpush1.msra.mxu0 0.0
    %510 = vmatprep.subr.mxu0 0.0
    %511 = vmatpush1.msra.mxu0 0.0
    %512 = vmatprep.subr.mxu0 0.0
    %513 = vmatpush1.msra.mxu0 0.0
    %514 = vmatprep.subr.mxu0 0.0
    %515 = vmatpush1.msra.mxu0 0.0
    %516 = vmatprep.subr.mxu0 0.0
    %517 = vmatpush1.msra.mxu0 0.0
    %518 = vmatprep.subr.mxu0 0.0
    %519 = vmatpush1.msra.mxu0 0.0
    %520 = vmatprep.subr.mxu0 0.0
    %521 = vmatpush1.msra.mxu0 0.0
    %522 = vmatprep.subr.mxu0 0.0
    %523 = vmatpush1.msra.mxu0 0.0
    %524 = vmatprep.subr.mxu0 0.0
    %525 = vmatpush1.msra.mxu0 0.0
    %526 = vmatprep.subr.mxu0 0.0
    %527 = vmatpush1.msra.mxu0 0.0
    %528 = vmatprep.subr.mxu0 0.0
    %529 = vmatpush1.msra.mxu0 0.0
    %530 = vmatprep.subr.mxu0 0.0
    %531 = vmatpush1.msra.mxu0 0.0
    %532 = vmatprep.subr.mxu0 0.0
    %533 = vmatpush1.msra.mxu0 0.0
    %534 = vmatprep.subr.mxu0 0.0
    %535 = vmatpush1.msra.mxu0 0.0
    %536 = vmatprep.subr.mxu0 0.0
    %537 = vmatpush1.msra.mxu0 0.0
    %538 = vmatprep.subr.mxu0 0.0
    %539 = vmatpush1.msra.mxu0 0.0
    %540 = vmatprep.subr.mxu0 0.0
    %541 = vmatpush1.msra.mxu0 0.0
    %542 = vmatprep.subr.mxu0 0.0
    %543 = vmatpush1.msra.mxu0 0.0
    %544 = vmatprep.mubr.f32.mxu0 0.0
    %545 = vmatmul.mubr.f32.gmra.mrb[0].mxu0 %v478
    %v546 = vpop.f32.mrb[0].mxu0
    %v547 = vadd.f32 0.0, %v546
    %v548 = vpop.f32.mrb[0].mxu0
    %549 = vdwg.mxu0
    %v550 = vadd.f32 %v471, %v547
    %v551 = vld [vmem:[%s5 + $0x2] sm:$0x1]
    %v552 = vadd.f32 %v550, %v551
    %v553 = vxor.u32 %v552, 2147483648
    %v554 = vmul.f32 %v553, 1.442695
    %v555 = vpow.pop %v554
    %v556 = vadd.f32 %v555, 1.0
    %v557 = vrcp.pop %v556
    %v558 = vmul.f32 1.0, %v557
    %v559 = vld [vmem:[%s5 + $0x3] sm:$0x1]
    %561 = vrot.lane.b32.xlu0 %v559, 64
    %v562 = vpop.permute.xlu0 %561
    %v564 = vadd.f32 %v471, %v562
    %v565 = vld [vmem:[%s5 + $0x4] sm:$0x1]
    %567 = vrot.lane.b32.xlu0 %v565, 64
    %v568 = vpop.permute.xlu0 %567
    %v570 = vadd.f32 %v547, %v568
    %572 = vrot.lane.b32.xlu0 %v570, 64
    %v573 = vpop.permute.xlu0 %572
    %v575 = vmul.f32 %v558, %v573
    %577 = vrot.lane.b32.xlu0 %v575, 64
    %v578 = vpop.permute.xlu0 %577
    %v580 = vadd.f32 %v564, %v578
    %v581 = vtanh.pop %v580
    %v582 = vsub.f32 1.0, %v558
    %584 = vrot.lane.b32.xlu0 %v581, 96
    %v585 = vpop.permute.xlu0 %584
    %v587 = vmul.f32 %v582, %v585
    %v588 = vmul.f32 %v558, %v130
    %v589 = vadd.f32 %v587, %v588
    %v590 = vld [vmem:[#allocation4 + $0x18] sm:$0xff]
    %v591 = vld [vmem:[#allocation4 + $0x38] sm:$0xff]
    %v592 = vld [vmem:[#allocation4 + $0x58] sm:$0xff]
    %v593 = vld [vmem:[#allocation4 + $0x78] sm:$0xff]
    %v594 = vld [vmem:[%s5 + $0x5] sm:$0x1]
    %596 = vrot.lane.b32.xlu0 %v589, 96
    %v597 = vpop.permute.xlu0 %596
    %v598 = vsel %vm132, %v597, 0
    %600 = vmatprep.subr.mxu0 0.0
    %601 = vmatpush1.msra.mxu0 %v590
    %602 = vmatprep.subr.mxu0 0.0
    %603 = vmatpush1.msra.mxu0 %v591
    %604 = vmatprep.subr.mxu0 0.0
    %605 = vmatpush1.msra.mxu0 %v592
    %606 = vmatprep.subr.mxu0 0.0
    %607 = vmatpush1.msra.mxu0 %v593
    %608 = vmatprep.subr.mxu0 0.0
    %609 = vmatpush1.msra.mxu0 0.0
    %610 = vmatprep.subr.mxu0 0.0
    %611 = vmatpush1.msra.mxu0 0.0
    %612 = vmatprep.subr.mxu0 0.0
    %613 = vmatpush1.msra.mxu0 0.0
    %614 = vmatprep.subr.mxu0 0.0
    %615 = vmatpush1.msra.mxu0 0.0
    %616 = vmatprep.subr.mxu0 0.0
    %617 = vmatpush1.msra.mxu0 0.0
    %618 = vmatprep.subr.mxu0 0.0
    %619 = vmatpush1.msra.mxu0 0.0
    %620 = vmatprep.subr.mxu0 0.0
    %621 = vmatpush1.msra.mxu0 0.0
    %622 = vmatprep.subr.mxu0 0.0
    %623 = vmatpush1.msra.mxu0 0.0
    %624 = vmatprep.subr.mxu0 0.0
    %625 = vmatpush1.msra.mxu0 0.0
    %626 = vmatprep.subr.mxu0 0.0
    %627 = vmatpush1.msra.mxu0 0.0
    %628 = vmatprep.subr.mxu0 0.0
    %629 = vmatpush1.msra.mxu0 0.0
    %630 = vmatprep.subr.mxu0 0.0
    %631 = vmatpush1.msra.mxu0 0.0
    %632 = vmatprep.subr.mxu0 0.0
    %633 = vmatpush1.msra.mxu0 0.0
    %634 = vmatprep.subr.mxu0 0.0
    %635 = vmatpush1.msra.mxu0 0.0
    %636 = vmatprep.subr.mxu0 0.0
    %637 = vmatpush1.msra.mxu0 0.0
    %638 = vmatprep.subr.mxu0 0.0
    %639 = vmatpush1.msra.mxu0 0.0
    %640 = vmatprep.subr.mxu0 0.0
    %641 = vmatpush1.msra.mxu0 0.0
    %642 = vmatprep.subr.mxu0 0.0
    %643 = vmatpush1.msra.mxu0 0.0
    %644 = vmatprep.subr.mxu0 0.0
    %645 = vmatpush1.msra.mxu0 0.0
    %646 = vmatprep.subr.mxu0 0.0
    %647 = vmatpush1.msra.mxu0 0.0
    %648 = vmatprep.subr.mxu0 0.0
    %649 = vmatpush1.msra.mxu0 0.0
    %650 = vmatprep.subr.mxu0 0.0
    %651 = vmatpush1.msra.mxu0 0.0
    %652 = vmatprep.subr.mxu0 0.0
    %653 = vmatpush1.msra.mxu0 0.0
    %654 = vmatprep.subr.mxu0 0.0
    %655 = vmatpush1.msra.mxu0 0.0
    %656 = vmatprep.subr.mxu0 0.0
    %657 = vmatpush1.msra.mxu0 0.0
    %658 = vmatprep.subr.mxu0 0.0
    %659 = vmatpush1.msra.mxu0 0.0
    %660 = vmatprep.subr.mxu0 0.0
    %661 = vmatpush1.msra.mxu0 0.0
    %662 = vmatprep.subr.mxu0 0.0
    %663 = vmatpush1.msra.mxu0 0.0
    %664 = vmatprep.mubr.f32.mxu0 0.0
    %665 = vmatmul.mubr.f32.gmra.mrb[0].mxu0 %v598
    %v666 = vpop.f32.mrb[0].mxu0
    %v667 = vadd.f32 %v594, %v666
    %v668 = vpop.f32.mrb[0].mxu0
    %669 = vdwg.mxu0
    %v670 = vsel %vm217, %v667, -inf
    %671 = vmax.xlane.f32.xlu0 %v670
    %v672 = vpop.xlane.xlu0 %671
    %v673 = vsub.f32 %v667, %v672
    %v674 = vmul.f32 %v673, 1.442695
    %v675 = vpow.pop %v674
    %v676 = vsel %vm217, %v675, 0.0
    %677 = vadd.xlane.f32.xlu0 %v676
    %v678 = vpop.xlane.xlu0 %677
    %v679 = vlog2.pop %v678
    %v680 = vmul.f32 %v679, 0.6931472
    %v681 = vadd.f32 %v672, %v680
    %v682 = vsub.f32 %v667, %v681
    %v684 = vsel %vm132, %v597, 0.0
    %v686 = vrot.slane %v684, 7
    %v688 = vrot.slane %v228, 6
    %v690 = vsel %vm217, %v682, %v686
    %v691 = vsel %vm235, %v690, %v688
    %692 = vst [vmem:[#allocation7] sm:$0x7] %v691
    // Predicated region
    $region26: #{tpu_custom_call.1} parent=1 // pred_check
      _
    $region27: #{tpu_custom_call.1} parent=1 // pred_check_branch
      %694 = sbr.rel (0) target = $region29
    $region28: #{tpu_custom_call.1} parent=1 // pred_region
      %s696 = ssub.s32 64, 64
      %697 = vsyncadd [#allocation6], %s696
      %s699 = sshll.u32 [#allocation7], 4
      %s700 = int_to_ptr.vmem [resolvable:$true] %s699
      %702 = dma.vmem_to_hbm [thread:$0]  %s700, 64, %s6, [#allocation6]
    $region29: #{tpu_custom_call.1} parent=1 // pred_fallthru
      _
    // Predicated region
    $region30: #{tpu_custom_call.1} parent=1 // pred_check
      _
    $region31: #{tpu_custom_call.1} parent=1 // pred_check_branch
      %704 = sbr.rel (0) target = $region33
    $region32: #{tpu_custom_call.1} parent=1 // pred_region
      %705 = dma.done [#allocation6], 64
    $region33: #{tpu_custom_call.1} parent=1 // pred_fallthru
      _
    %706 = vsyncpa [#allocation5], 1
    %707 = vsyncpa [#allocation6], 1

</llo_original>
